<compile_context>
chip_gen: v5e
topology: v5e:2x2
jax: 0.10.0
libtpu: 0.0.40
codegen_flags: <defaults>
</compile_context>

<pallas_src>
import jax
import jax.numpy as jnp
from jax.experimental import pallas as pl
from jax.experimental.pallas import tpu as pltpu


def _shared_value_kernel(x_ref, w_emb_ref, w1_ref, w2_ref, b_ref, o_ref):
    """x: (B, Din) = [s|a];  w_emb: (Din, 2E) block-diag;  w1: (2E, H);
    w2: (H, P) zero-padded final layer;  b: (3, BP) stacked biases;
    o: (B, P) lane-dense output (value in lane 0)."""
    two_e = w_emb_ref.shape[1]
    hid = w1_ref.shape[1]
    outw = w2_ref.shape[1]

    x = x_ref[...]

    # embed layer: cat([s @ Ws + bs, a @ Wa + ba]) == [s|a] @ blockdiag(Ws, Wa) + [bs|ba]
    emb = (jnp.dot(x, w_emb_ref[...], preferred_element_type=jnp.float32)
           + b_ref[0:1, :two_e])

    # first affine over relu(concat)
    h = (jnp.dot(jnp.maximum(emb, 0.0), w1_ref[...],
                 preferred_element_type=jnp.float32)
         + b_ref[1:2, :hid])

    # final affine over relu(h); weight/bias are zero-padded to `outw` lanes,
    # so lane 0 holds the value and lanes 1.. are exactly zero.
    y = (jnp.dot(jnp.maximum(h, 0.0), w2_ref[...],
                 preferred_element_type=jnp.float32)
         + b_ref[2:3, :outw])

    o_ref[...] = y


def pack_params(p):
    """Pack raw per-layer params into 4 kernel arrays (plus x built per call)."""
    sd, E = p["ws"].shape
    ad = p["wa"].shape[0]
    two_e = 2 * E
    H = p["w1"].shape[1]
    P = 128                      # lane-dense padded width for the 1-unit head
    BP = max(128, two_e, H)      # stacked-bias row width

    w_emb = jnp.zeros((sd + ad, two_e), jnp.float32)
    w_emb = w_emb.at[:sd, :E].set(p["ws"])
    w_emb = w_emb.at[sd:, E:].set(p["wa"])

    w2p = jnp.zeros((H, P), jnp.float32).at[:, :1].set(p["w2"])

    biases = jnp.zeros((3, BP), jnp.float32)
    biases = biases.at[0, :two_e].set(
        jnp.concatenate([p["bs"], p["ba"]], axis=1).reshape(-1))
    biases = biases.at[1, :H].set(p["b1"].reshape(-1))
    biases = biases.at[2, :1].set(p["b2"].reshape(-1))

    return {"w_emb": w_emb, "w1": p["w1"], "w2p": w2p, "biases": biases}


def shared_value_cat(s, a, packed, partial_idx=None):
    """Forward pass. Returns (B, 1) value."""
    if partial_idx is not None:                 # partial=True column selection
        a = a[:, jnp.asarray(partial_idx)]      # (host-side gather)
    B = s.shape[0]
    x = jnp.concatenate([s, a], axis=1)

    w_emb, w1, w2p, biases = (packed["w_emb"], packed["w1"],
                              packed["w2p"], packed["biases"])
    din, two_e = w_emb.shape
    H = w1.shape[1]
    P = w2p.shape[1]

    flops = 2 * B * (din * two_e + two_e * H + H * P)
    bytes_accessed = 4 * (x.size + w_emb.size + w1.size + w2p.size
                          + biases.size + B * P)

    y = pl.pallas_call(
        _shared_value_kernel,
        out_shape=jax.ShapeDtypeStruct((B, P), jnp.float32),
        in_specs=[pl.BlockSpec(memory_space=pltpu.MemorySpace.VMEM)] * 5,
        out_specs=pl.BlockSpec(memory_space=pltpu.MemorySpace.VMEM),
        cost_estimate=pl.CostEstimate(flops=flops, transcendentals=0,
                                      bytes_accessed=bytes_accessed),
    )(x, w_emb, w1, w2p, biases)

    return y[:, :1]


def init_params(key, state_dim, action_dim, embed_dim, hidden_dim):
    """Deterministic synthetic parameters. Weights are (in, out); biases (1, out)."""
    ks = jax.random.split(key, 8)

    def lin(kw, kb, din, dout):
        w = jax.random.normal(kw, (din, dout), jnp.float32) * (1.0 / jnp.sqrt(din))
        b = jax.random.normal(kb, (1, dout), jnp.float32) * 0.01
        return w, b

    p = {}
    p["ws"], p["bs"] = lin(ks[0], ks[1], state_dim, embed_dim)    # state_embed
    p["wa"], p["ba"] = lin(ks[2], ks[3], action_dim, embed_dim)   # action_embed
    p["w1"], p["b1"] = lin(ks[4], ks[5], 2 * embed_dim, hidden_dim)
    p["w2"], p["b2"] = lin(ks[6], ks[7], hidden_dim, 1)
    return p


def reference(s, a, p):
    """Pure-JAX reference mirroring the PyTorch forward (concat form)."""
    x = jnp.concatenate([s @ p["ws"] + p["bs"], a @ p["wa"] + p["ba"]], axis=1)
    x = jnp.maximum(x, 0.0) @ p["w1"] + p["b1"]
    x = jnp.maximum(x, 0.0) @ p["w2"] + p["b2"]
    return x


if __name__ == "__main__":
    # Small shapes consistent with the module's forward.
    # 2*EMBED_DIM = HIDDEN_DIM = 128 keeps every matmul 128-lane dense.
    B, STATE_DIM, ACTION_DIM, EMBED_DIM, HIDDEN_DIM = 8, 16, 8, 64, 128

    key = jax.random.PRNGKey(0)
    k_s, k_a, k_p = jax.random.split(key, 3)
    s = jax.random.normal(k_s, (B, STATE_DIM), jnp.float32)
    a = jax.random.normal(k_a, (B, ACTION_DIM), jnp.float32)

    params = init_params(k_p, STATE_DIM, ACTION_DIM, EMBED_DIM, HIDDEN_DIM)
    packed = pack_params(params)

    y = shared_value_cat(s, a, packed)
    jax.block_until_ready(y)

    r = reference(s, a, params)
    assert y.shape == (B, 1)
    assert jnp.allclose(y, r, atol=1e-4, rtol=1e-4)

    print("KERNEL_OK")
</pallas_src>

<mosaic_0001>
module attributes {stable_mosaic.version = 11 : i64} {
  func.func @_shared_value_kernel(%arg0: memref<8x24xf32, #tpu.memory_space<vmem>>, %arg1: memref<24x128xf32, #tpu.memory_space<vmem>>, %arg2: memref<128x128xf32, #tpu.memory_space<vmem>>, %arg3: memref<128x128xf32, #tpu.memory_space<vmem>>, %arg4: memref<3x128xf32, #tpu.memory_space<vmem>>, %arg5: memref<8x128xf32, #tpu.memory_space<vmem>>) attributes {dimension_semantics = [], scalar_prefetch = 0 : i64, scratch_operands = 0 : i64, tpu.core_type = #tpu.core_type<tc>} {
    %c0 = arith.constant 0 : index
    %c0_0 = arith.constant 0 : index
    %0 = vector.load %arg0[%c0, %c0_0] : memref<8x24xf32, #tpu.memory_space<vmem>>, vector<8x24xf32>
    %c0_1 = arith.constant 0 : index
    %c0_2 = arith.constant 0 : index
    %1 = vector.load %arg1[%c0_1, %c0_2] : memref<24x128xf32, #tpu.memory_space<vmem>>, vector<24x128xf32>
    %cst = arith.constant dense<0.000000e+00> : vector<8x128xf32>
    %2 = tpu.matmul %0, %1, %cst {dimension_numbers = #tpu.dot_dimension_numbers<[1], [0], [0], [1], [0, 0, 1, 1], [], []>} : vector<8x24xf32>, vector<24x128xf32>, vector<8x128xf32> -> vector<8x128xf32>
    %c0_3 = arith.constant 0 : index
    %c0_4 = arith.constant 0 : index
    %3 = vector.load %arg4[%c0_3, %c0_4] : memref<3x128xf32, #tpu.memory_space<vmem>>, vector<1x128xf32>
    %4 = vector.broadcast %3 : vector<1x128xf32> to vector<8x128xf32>
    %5 = arith.addf %2, %4 : vector<8x128xf32>
    %cst_5 = arith.constant 0.000000e+00 : f32
    %6 = vector.broadcast %cst_5 : f32 to vector<8x128xf32>
    %7 = arith.maximumf %5, %6 : vector<8x128xf32>
    %c0_6 = arith.constant 0 : index
    %c0_7 = arith.constant 0 : index
    %8 = vector.load %arg2[%c0_6, %c0_7] : memref<128x128xf32, #tpu.memory_space<vmem>>, vector<128x128xf32>
    %cst_8 = arith.constant dense<0.000000e+00> : vector<8x128xf32>
    %9 = tpu.matmul %7, %8, %cst_8 {dimension_numbers = #tpu.dot_dimension_numbers<[1], [0], [0], [1], [0, 0, 1, 1], [], []>} : vector<8x128xf32>, vector<128x128xf32>, vector<8x128xf32> -> vector<8x128xf32>
    %c1 = arith.constant 1 : index
    %c0_9 = arith.constant 0 : index
    %10 = vector.load %arg4[%c1, %c0_9] : memref<3x128xf32, #tpu.memory_space<vmem>>, vector<1x128xf32>
    %11 = vector.broadcast %10 : vector<1x128xf32> to vector<8x128xf32>
    %12 = arith.addf %9, %11 : vector<8x128xf32>
    %cst_10 = arith.constant 0.000000e+00 : f32
    %13 = vector.broadcast %cst_10 : f32 to vector<8x128xf32>
    %14 = arith.maximumf %12, %13 : vector<8x128xf32>
    %c0_11 = arith.constant 0 : index
    %c0_12 = arith.constant 0 : index
    %15 = vector.load %arg3[%c0_11, %c0_12] : memref<128x128xf32, #tpu.memory_space<vmem>>, vector<128x128xf32>
    %cst_13 = arith.constant dense<0.000000e+00> : vector<8x128xf32>
    %16 = tpu.matmul %14, %15, %cst_13 {dimension_numbers = #tpu.dot_dimension_numbers<[1], [0], [0], [1], [0, 0, 1, 1], [], []>} : vector<8x128xf32>, vector<128x128xf32>, vector<8x128xf32> -> vector<8x128xf32>
    %c2 = arith.constant 2 : index
    %c0_14 = arith.constant 0 : index
    %17 = vector.load %arg4[%c2, %c0_14] : memref<3x128xf32, #tpu.memory_space<vmem>>, vector<1x128xf32>
    %18 = vector.broadcast %17 : vector<1x128xf32> to vector<8x128xf32>
    %19 = arith.addf %16, %18 : vector<8x128xf32>
    %c0_15 = arith.constant 0 : index
    %c0_16 = arith.constant 0 : index
    %20 = vector.load %arg5[%c0_15, %c0_16] : memref<8x128xf32, #tpu.memory_space<vmem>>, vector<8x128xf32>
    tpu.vector_store %arg5[%c0_15, %c0_16], %19 {strides = array<i32>} : memref<8x128xf32, #tpu.memory_space<vmem>>, vector<8x128xf32>,
    return
  }
}

</mosaic_0001>

<llo_original>
// kernel: tpu_custom_call.1
$region0: #{tpu_custom_call.1}
  #allocation0 [shape = 'u32[]', space=smem, size = 0x4, offset = 0x4, fixed_abs, tag = 'smem constant byte address 0x4 - core index']
  #allocation1 [shape = 'u32[72,128]{1,0:T(1,128)}', space=vmem, size = 0x9000, scoped, tag = 'internal scratch']
  %s0 = inlined_call_operand.hbm [shape: f32[8,24], index: 0, kind: input, shape index: {}]
  %s1 = inlined_call_operand.hbm [shape: f32[24,128], index: 1, kind: input, shape index: {}]
  %s2 = inlined_call_operand.hbm [shape: f32[128,128], index: 2, kind: input, shape index: {}]
  %s3 = inlined_call_operand.hbm [shape: f32[128,128], index: 3, kind: input, shape index: {}]
  %s4 = inlined_call_operand.hbm [shape: f32[3,128], index: 4, kind: input, shape index: {}]
  %s5 = inlined_call_operand.hbm [shape: f32[8,128], index: 5, kind: output, shape index: {}]
  %s6 = sld [smem:[#allocation0]]
  $region50: #{tpu_custom_call.1} parent=0
    _
  %s8 = ssub.s32 1, %s6
  %s9 = scalar_select 0, %s8, %s6
  $region1: #{tpu_custom_call.1} parent=0
    #allocation2 [shape = 'u8[4096]{0}', space=vmem, size = 0x1000, scoped, tag = 'input window, operand 0, single buffered']
    #allocation3 [shape = 's32[1]{0}', space=sflag, size = 0x4, scoped, tag = 'scoped memory for tpu_custom_call.1']
    #allocation4 [shape = 's32[1]{0}', space=sflag, size = 0x4, scoped, tag = 'scoped memory for tpu_custom_call.1']
    #allocation5 [shape = 'u8[12288]{0}', space=vmem, size = 0x3000, scoped, tag = 'input window, operand 1, single buffered']
    #allocation6 [shape = 's32[1]{0}', space=sflag, size = 0x4, scoped, tag = 'scoped memory for tpu_custom_call.1']
    #allocation7 [shape = 'u8[65536]{0}', space=vmem, size = 0x10000, scoped, tag = 'input window, operand 2, single buffered']
    #allocation8 [shape = 'u8[65536]{0}', space=vmem, size = 0x10000, scoped, tag = 'input window, operand 3, single buffered']
    #allocation9 [shape = 's32[1]{0}', space=sflag, size = 0x4, scoped, tag = 'scoped memory for tpu_custom_call.1']
    #allocation10 [shape = 'u8[2048]{0}', space=vmem, size = 0x800, scoped, tag = 'input window, operand 4, single buffered']
    #allocation11 [shape = 'u8[4096]{0}', space=vmem, size = 0x1000, scoped, tag = 'output window, operand 0, single buffered']
    %10 = vsyncpa [#allocation3], 0
    %11 = vsyncpa [#allocation6], 0
    %12 = vsyncpa [#allocation9], 0
    %13 = vsyncpa [#allocation4], 0
    // Predicated region
    $region2: #{tpu_custom_call.1} parent=1 // pred_check
      _
    $region3: #{tpu_custom_call.1} parent=1 // pred_check_branch
      %15 = sbr.rel (0) target = $region5
    $region4: #{tpu_custom_call.1} parent=1 // pred_region
      %17 = vsyncadd [#allocation3], 0
      %s19 = sshll.u32 %s0, 4
      %s20 = int_to_ptr.hbm [resolvable:$true] %s19
      %s21 = sshll.u32 [#allocation2], 4
      %s22 = int_to_ptr.vmem [resolvable:$true] %s21
      %24 = dma.hbm_to_vmem [thread:$0]  %s20, 128, %s22, [#allocation3]
    $region5: #{tpu_custom_call.1} parent=1 // pred_fallthru
      _
    // Predicated region
    $region6: #{tpu_custom_call.1} parent=1 // pred_check
      _
    $region7: #{tpu_custom_call.1} parent=1 // pred_check_branch
      %26 = sbr.rel (0) target = $region9
    $region8: #{tpu_custom_call.1} parent=1 // pred_region
      %28 = vsyncadd [#allocation6], 0
      %s29 = sshll.u32 %s1, 4
      %s30 = int_to_ptr.hbm [resolvable:$true] %s29
      %s31 = sshll.u32 [#allocation5], 4
      %s32 = int_to_ptr.vmem [resolvable:$true] %s31
      %37 = dma.hbm_to_vmem [thread:$0]  %s30, 384, %s32, [#allocation6], 128, 128, 8
    $region9: #{tpu_custom_call.1} parent=1 // pred_fallthru
      _
    // Predicated region
    $region10: #{tpu_custom_call.1} parent=1 // pred_check
      _
    $region11: #{tpu_custom_call.1} parent=1 // pred_check_branch
      %39 = sbr.rel (0) target = $region13
    $region12: #{tpu_custom_call.1} parent=1 // pred_region
      %41 = vsyncadd [#allocation6], 0
      %s42 = sshll.u32 %s2, 4
      %s43 = int_to_ptr.hbm [resolvable:$true] %s42
      %s44 = sshll.u32 [#allocation7], 4
      %s45 = int_to_ptr.vmem [resolvable:$true] %s44
      %50 = dma.hbm_to_vmem [thread:$0]  %s43, 2048, %s45, [#allocation6], 128, 128, 8
    $region13: #{tpu_custom_call.1} parent=1 // pred_fallthru
      _
    // Predicated region
    $region14: #{tpu_custom_call.1} parent=1 // pred_check
      _
    $region15: #{tpu_custom_call.1} parent=1 // pred_check_branch
      %52 = sbr.rel (0) target = $region17
    $region16: #{tpu_custom_call.1} parent=1 // pred_region
      %54 = vsyncadd [#allocation9], 0
      %s55 = sshll.u32 %s3, 4
      %s56 = int_to_ptr.hbm [resolvable:$true] %s55
      %s57 = sshll.u32 [#allocation8], 4
      %s58 = int_to_ptr.vmem [resolvable:$true] %s57
      %63 = dma.hbm_to_vmem [thread:$0]  %s56, 2048, %s58, [#allocation9], 128, 128, 8
    $region17: #{tpu_custom_call.1} parent=1 // pred_fallthru
      _
    // Predicated region
    $region18: #{tpu_custom_call.1} parent=1 // pred_check
      _
    $region19: #{tpu_custom_call.1} parent=1 // pred_check_branch
      %65 = sbr.rel (0) target = $region21
    $region20: #{tpu_custom_call.1} parent=1 // pred_region
      %67 = vsyncadd [#allocation9], 0
      %s69 = sshll.u32 %s4, 4
      %s70 = int_to_ptr.hbm [resolvable:$true] %s69
      %s71 = sshll.u32 [#allocation10], 4
      %s72 = int_to_ptr.vmem [resolvable:$true] %s71
      %74 = dma.hbm_to_vmem [thread:$0]  %s70, 64, %s72, [#allocation9]
    $region21: #{tpu_custom_call.1} parent=1 // pred_fallthru
      _
    // Predicated region
    $region22: #{tpu_custom_call.1} parent=1 // pred_check
      _
    $region23: #{tpu_custom_call.1} parent=1 // pred_check_branch
      %76 = sbr.rel (0) target = $region25
    $region24: #{tpu_custom_call.1} parent=1 // pred_region
      %78 = dma.done [#allocation3], 128
    $region25: #{tpu_custom_call.1} parent=1 // pred_fallthru
      _
    // Predicated region
    $region26: #{tpu_custom_call.1} parent=1 // pred_check
      _
    $region27: #{tpu_custom_call.1} parent=1 // pred_check_branch
      %80 = sbr.rel (0) target = $region29
    $region28: #{tpu_custom_call.1} parent=1 // pred_region
      %82 = dma.done [#allocation6], 384
    $region29: #{tpu_custom_call.1} parent=1 // pred_fallthru
      _
    // Predicated region
    $region30: #{tpu_custom_call.1} parent=1 // pred_check
      _
    $region31: #{tpu_custom_call.1} parent=1 // pred_check_branch
      %84 = sbr.rel (0) target = $region33
    $region32: #{tpu_custom_call.1} parent=1 // pred_region
      %86 = dma.done [#allocation6], 2048
    $region33: #{tpu_custom_call.1} parent=1 // pred_fallthru
      _
    // Predicated region
    $region34: #{tpu_custom_call.1} parent=1 // pred_check
      _
    $region35: #{tpu_custom_call.1} parent=1 // pred_check_branch
      %88 = sbr.rel (0) target = $region37
    $region36: #{tpu_custom_call.1} parent=1 // pred_region
      %90 = dma.done [#allocation9], 2048
    $region37: #{tpu_custom_call.1} parent=1 // pred_fallthru
      _
    // Predicated region
    $region38: #{tpu_custom_call.1} parent=1 // pred_check
      _
    $region39: #{tpu_custom_call.1} parent=1 // pred_check_branch
      %92 = sbr.rel (0) target = $region41
    $region40: #{tpu_custom_call.1} parent=1 // pred_region
      %94 = dma.done [#allocation9], 64
    $region41: #{tpu_custom_call.1} parent=1 // pred_fallthru
      _
    %v95 = vld [vmem:[#allocation2] sm:$0xff]
    %v96 = vld [vmem:[#allocation5] sm:$0xff]
    %v97 = vld [vmem:[#allocation5 + $0x8] sm:$0xff]
    %v98 = vld [vmem:[#allocation5 + $0x10] sm:$0xff]
    %v99 = vld [vmem:[#allocation10] sm:$0x1]
    %v100 = vperm.slane %v99, 0
    %vm101 = vcmask 195584
    %v103 = vsel %vm101, %v95, 0
    %105 = vmatpush.msra.mxu0 0.0
    %106 = vmatpush.msra.mxu0 0.0
    %107 = vmatpush.msra.mxu0 0.0
    %108 = vmatpush.msra.mxu0 0.0
    %109 = vmatpush.msra.mxu0 0.0
    %110 = vmatpush.msra.mxu0 0.0
    %111 = vmatpush.msra.mxu0 0.0
    %112 = vmatpush.msra.mxu0 0.0
    %113 = vmatpush.msra.mxu0 0.0
    %114 = vmatpush.msra.mxu0 0.0
    %115 = vmatpush.msra.mxu0 0.0
    %116 = vmatpush.msra.mxu0 0.0
    %117 = vmatpush.msra.mxu0 0.0
    %118 = vmatpush.msra.mxu0 %v98
    %119 = vmatpush.msra.mxu0 %v97
    %120 = vmatpush.msra.mxu0 %v96
    %121 = vmatmul.f32.gmra.mxu0 %v103
    %v122 = vpop.f32.mrf.mxu0
    %v123 = vadd.f32 %v100, %v122
    %124 = vdwg.mxu0
    %v125 = vmax.f32 %v123, 0.0
    %v126 = vld [vmem:[#allocation7] sm:$0xff]
    %v127 = vld [vmem:[#allocation7 + $0x8] sm:$0xff]
    %v128 = vld [vmem:[#allocation7 + $0x10] sm:$0xff]
    %v129 = vld [vmem:[#allocation7 + $0x18] sm:$0xff]
    %v130 = vld [vmem:[#allocation7 + $0x20] sm:$0xff]
    %v131 = vld [vmem:[#allocation7 + $0x28] sm:$0xff]
    %v132 = vld [vmem:[#allocation7 + $0x30] sm:$0xff]
    %v133 = vld [vmem:[#allocation7 + $0x38] sm:$0xff]
    %v134 = vld [vmem:[#allocation7 + $0x40] sm:$0xff]
    %v135 = vld [vmem:[#allocation7 + $0x48] sm:$0xff]
    %v136 = vld [vmem:[#allocation7 + $0x50] sm:$0xff]
    %v137 = vld [vmem:[#allocation7 + $0x58] sm:$0xff]
    %v138 = vld [vmem:[#allocation7 + $0x60] sm:$0xff]
    %v139 = vld [vmem:[#allocation7 + $0x68] sm:$0xff]
    %v140 = vld [vmem:[#allocation7 + $0x70] sm:$0xff]
    %v141 = vld [vmem:[#allocation7 + $0x78] sm:$0xff]
    %v142 = vld [vmem:[#allocation10 + $0x1] sm:$0x1]
    %v143 = vperm.slane %v142, 0
    %144 = vmatpush.msra.mxu0 %v141
    %145 = vmatpush.msra.mxu0 %v140
    %146 = vmatpush.msra.mxu0 %v139
    %147 = vmatpush.msra.mxu0 %v138
    %148 = vmatpush.msra.mxu0 %v137
    %149 = vmatpush.msra.mxu0 %v136
    %150 = vmatpush.msra.mxu0 %v135
    %151 = vmatpush.msra.mxu0 %v134
    %152 = vmatpush.msra.mxu0 %v133
    %153 = vmatpush.msra.mxu0 %v132
    %154 = vmatpush.msra.mxu0 %v131
    %155 = vmatpush.msra.mxu0 %v130
    %156 = vmatpush.msra.mxu0 %v129
    %157 = vmatpush.msra.mxu0 %v128
    %158 = vmatpush.msra.mxu0 %v127
    %159 = vmatpush.msra.mxu0 %v126
    %160 = vmatmul.f32.gmra.mxu0 %v125
    %v161 = vpop.f32.mrf.mxu0
    %v162 = vadd.f32 %v143, %v161
    %163 = vdwg.mxu0
    %v164 = vmax.f32 %v162, 0.0
    %v165 = vld [vmem:[#allocation8] sm:$0xff]
    %v166 = vld [vmem:[#allocation8 + $0x8] sm:$0xff]
    %v167 = vld [vmem:[#allocation8 + $0x10] sm:$0xff]
    %v168 = vld [vmem:[#allocation8 + $0x18] sm:$0xff]
    %v169 = vld [vmem:[#allocation8 + $0x20] sm:$0xff]
    %v170 = vld [vmem:[#allocation8 + $0x28] sm:$0xff]
    %v171 = vld [vmem:[#allocation8 + $0x30] sm:$0xff]
    %v172 = vld [vmem:[#allocation8 + $0x38] sm:$0xff]
    %v173 = vld [vmem:[#allocation8 + $0x40] sm:$0xff]
    %v174 = vld [vmem:[#allocation8 + $0x48] sm:$0xff]
    %v175 = vld [vmem:[#allocation8 + $0x50] sm:$0xff]
    %v176 = vld [vmem:[#allocation8 + $0x58] sm:$0xff]
    %v177 = vld [vmem:[#allocation8 + $0x60] sm:$0xff]
    %v178 = vld [vmem:[#allocation8 + $0x68] sm:$0xff]
    %v179 = vld [vmem:[#allocation8 + $0x70] sm:$0xff]
    %v180 = vld [vmem:[#allocation8 + $0x78] sm:$0xff]
    %v181 = vld [vmem:[#allocation10 + $0x2] sm:$0x1]
    %v182 = vperm.slane %v181, 0
    %183 = vmatpush.msra.mxu0 %v180
    %184 = vmatpush.msra.mxu0 %v179
    %185 = vmatpush.msra.mxu0 %v178
    %186 = vmatpush.msra.mxu0 %v177
    %187 = vmatpush.msra.mxu0 %v176
    %188 = vmatpush.msra.mxu0 %v175
    %189 = vmatpush.msra.mxu0 %v174
    %190 = vmatpush.msra.mxu0 %v173
    %191 = vmatpush.msra.mxu0 %v172
    %192 = vmatpush.msra.mxu0 %v171
    %193 = vmatpush.msra.mxu0 %v170
    %194 = vmatpush.msra.mxu0 %v169
    %195 = vmatpush.msra.mxu0 %v168
    %196 = vmatpush.msra.mxu0 %v167
    %197 = vmatpush.msra.mxu0 %v166
    %198 = vmatpush.msra.mxu0 %v165
    %199 = vmatmul.f32.gmra.mxu0 %v164
    %v200 = vpop.f32.mrf.mxu0
    %v201 = vadd.f32 %v182, %v200
    %202 = vdwg.mxu0
    %203 = vst [vmem:[#allocation11] sm:$0xff] %v201
    // Predicated region
    $region42: #{tpu_custom_call.1} parent=1 // pred_check
      _
    $region43: #{tpu_custom_call.1} parent=1 // pred_check_branch
      %205 = sbr.rel (0) target = $region45
    $region44: #{tpu_custom_call.1} parent=1 // pred_region
      %207 = vsyncadd [#allocation4], 0
      %s209 = sshll.u32 [#allocation11], 4
      %s210 = int_to_ptr.vmem [resolvable:$true] %s209
      %s211 = sshll.u32 %s5, 4
      %s212 = int_to_ptr.hbm [resolvable:$true] %s211
      %214 = dma.vmem_to_hbm [thread:$0]  %s210, 128, %s212, [#allocation4]
    $region45: #{tpu_custom_call.1} parent=1 // pred_fallthru
      _
    // Predicated region
    $region46: #{tpu_custom_call.1} parent=1 // pred_check
      _
    $region47: #{tpu_custom_call.1} parent=1 // pred_check_branch
      %216 = sbr.rel (0) target = $region49
    $region48: #{tpu_custom_call.1} parent=1 // pred_region
      %218 = dma.done [#allocation4], 128
    $region49: #{tpu_custom_call.1} parent=1 // pred_fallthru
      _
    %219 = vsyncpa [#allocation3], 1
    %220 = vsyncpa [#allocation6], 1
    %221 = vsyncpa [#allocation9], 1
    %222 = vsyncpa [#allocation4], 1

</llo_original>
